<compile_context>
chip_gen: v7x
topology: tpu7x:2x2x1
jax: 0.10.0
libtpu: 0.0.40
codegen_flags: <defaults>
</compile_context>

<pallas_src>
import functools
import math

import jax
import jax.numpy as jnp
from jax.experimental import pallas as pl
from jax.experimental.pallas import tpu as pltpu

EPS = 1e-5
NEG_INF = -1e30
LANES = 128
VMEM_LIMIT = 48 * 1024 * 1024   # explicit scoped-VMEM budget (fits v5e/v6e/v7x)


def _rmsnorm(x, w):
    # weight * x / sqrt(mean(x^2, -1) + eps); rsqrt goes to the EUP slot.
    ms = jnp.mean(x * x, axis=-1, keepdims=True)
    return x * jax.lax.rsqrt(ms + EPS) * w


def _silu(z):
    # z * sigmoid(z) written with jnp.exp so it lowers cleanly to the EUP.
    return z / (1.0 + jnp.exp(-z))


def _pick_tile(total, target, multiple):
    """Largest divisor of `total` that is a multiple of `multiple` and <= target.
    Returns `total` itself if total <= target (full-dim block is always legal)."""
    if total <= target:
        return total
    best = None
    for cand in range(multiple, target + 1, multiple):
        if total % cand == 0:
            best = cand
    return best if best is not None else total


# --------------------------------------------------------------------------- #
# Kernel 1: input RMSNorm (hoisted) + N-tiled fused QKV projection
# --------------------------------------------------------------------------- #
def _qkv_proj_kernel(x_ref, w_norm_ref, wqkv_ref, o_ref, xn_ref):
    # x_ref: (1, ts, H) f32 (invariant across the N axis)
    # wqkv_ref: (H, tn) bf16 weight slab; o_ref: (1, ts, tn) bf16
    @pl.when(pl.program_id(2) == 0)
    def _():
        xn_ref[...] = _rmsnorm(x_ref[0], w_norm_ref[...]).astype(jnp.bfloat16)

    o_ref[0] = jnp.dot(xn_ref[...], wqkv_ref[...],
                       preferred_element_type=jnp.float32).astype(jnp.bfloat16)


def qkv_proj(x, w_in_norm, wqkv, *, ts, tn):
    B, S, H = x.shape
    H3 = wqkv.shape[1]
    return pl.pallas_call(
        _qkv_proj_kernel,
        out_shape=jax.ShapeDtypeStruct((B, S, H3), jnp.bfloat16),
        grid=(B, S // ts, H3 // tn),
        in_specs=[pl.BlockSpec((1, ts, H), lambda b, s, n: (b, s, 0)),
                  pl.BlockSpec((1, H), lambda b, s, n: (0, 0)),
                  pl.BlockSpec((H, tn), lambda b, s, n: (0, n))],
        out_specs=pl.BlockSpec((1, ts, tn), lambda b, s, n: (b, s, n)),
        scratch_shapes=[pltpu.VMEM((ts, H), jnp.bfloat16)],
        compiler_params=pltpu.CompilerParams(
            dimension_semantics=("parallel", "parallel", "arbitrary"),
            vmem_limit_bytes=VMEM_LIMIT),
    )(x, w_in_norm, wqkv)


# --------------------------------------------------------------------------- #
# Kernel 2: per-(batch, head, q-tile) causal attention with RoPE, flash-style
# --------------------------------------------------------------------------- #
def _flash_attn_kernel(scale, tq, tkv,
                       q_ref, k_ref, v_ref,
                       sinq_ref, cosq_ref, sink_ref, cosk_ref,
                       o_ref, qr_ref, m_sc, l_sc, acc_sc):
    qi = pl.program_id(2)
    kv_i = pl.program_id(3)
    hd = q_ref.shape[2]
    half = hd // 2

    # Last KV block that overlaps the causal region of this q tile; blocks
    # beyond it are entirely masked and their compute is skipped.
    last_kv = (qi * tq + tq - 1) // tkv

    @pl.when(kv_i == 0)
    def _():
        m_sc[...] = jnp.full_like(m_sc, NEG_INF)
        l_sc[...] = jnp.zeros_like(l_sc)
        acc_sc[...] = jnp.zeros_like(acc_sc)
        # --- q RoPE + scaling hoisted out of the KV loop (done once per tile) ---
        q = q_ref[0].astype(jnp.float32)                       # (tq, hd)
        qr = q * cosq_ref[...] + pltpu.roll(q, half, 1) * sinq_ref[...]
        qr_ref[...] = (qr * scale).astype(jnp.bfloat16)

    @pl.when(kv_i <= last_kv)
    def _():
        # --- k RoPE (f32): x*cos + roll_half(x)*sin_signed (sin pre-signed) ---
        k = k_ref[0].astype(jnp.float32)                       # (tkv, hd)
        kr = k * cosk_ref[...] + pltpu.roll(k, half, 1) * sink_ref[...]
        kr = kr.astype(jnp.bfloat16)

        # scores: q @ k^T without an explicit transpose
        s = jax.lax.dot_general(qr_ref[...], kr, (((1,), (1,)), ((), ())),
                                preferred_element_type=jnp.float32)   # (tq, tkv)

        q_idx = jax.lax.broadcasted_iota(jnp.int32, (tq, tkv), 0) + qi * tq
        k_idx = jax.lax.broadcasted_iota(jnp.int32, (tq, tkv), 1) + kv_i * tkv
        s = jnp.where(q_idx >= k_idx, s, NEG_INF)              # causal mask

        # --- online softmax update (lane-dense m/l statistics) ---
        m_prev = m_sc[...]                                     # (tq, 128), lanes equal
        m_prev1 = jnp.max(m_prev, axis=-1, keepdims=True)      # (tq, 1)
        m_new1 = jnp.maximum(m_prev1, jnp.max(s, axis=-1, keepdims=True))
        alpha1 = jnp.exp(m_prev1 - m_new1)                     # (tq, 1)
        p = jnp.exp(s - m_new1)                                # (tq, tkv)
        l_sc[...] = alpha1 * l_sc[...] + jnp.sum(p, axis=-1, keepdims=True)
        acc_sc[...] = alpha1 * acc_sc[...] + jnp.dot(
            p.astype(jnp.bfloat16), v_ref[0], preferred_element_type=jnp.float32)
        m_sc[...] = jnp.broadcast_to(m_new1, m_sc.shape)

    @pl.when(kv_i == last_kv)
    def _():
        l1 = jnp.max(l_sc[...], axis=-1, keepdims=True)        # (tq, 1)
        inv = pl.reciprocal(l1, approx=True)                   # EUP; ~1e-3 rel err, bf16 out
        o_ref[0] = (acc_sc[...] * inv).astype(o_ref.dtype)


def attention(qkv, sin, cos, num_heads, head_dim, *, tq, tkv):
    B, S, _ = qkv.shape
    H = num_heads * head_dim
    q_blocks = S // tq
    kv_blocks = S // tkv
    scale = 1.0 / math.sqrt(head_dim)

    kernel = functools.partial(_flash_attn_kernel, scale, tq, tkv)
    # TODO(synk): KV blocks above the diagonal still get DMA'd (compute is
    # skipped); a per-q-tile kv grid bound would also save that bandwidth.
    return pl.pallas_call(
        kernel,
        out_shape=jax.ShapeDtypeStruct((B, S, H), jnp.bfloat16),
        grid=(B, num_heads, q_blocks, kv_blocks),
        in_specs=[
            # q / k / v head tiles sliced out of the fused (B, S, 3H) tensor
            pl.BlockSpec((1, tq, head_dim),  lambda b, h, q, kv: (b, q, h)),
            pl.BlockSpec((1, tkv, head_dim), lambda b, h, q, kv: (b, kv, num_heads + h)),
            pl.BlockSpec((1, tkv, head_dim), lambda b, h, q, kv: (b, kv, 2 * num_heads + h)),
            # rotary tables: q-tile slice for q, kv-tile slice for k
            pl.BlockSpec((tq, head_dim),  lambda b, h, q, kv: (q, 0)),
            pl.BlockSpec((tq, head_dim),  lambda b, h, q, kv: (q, 0)),
            pl.BlockSpec((tkv, head_dim), lambda b, h, q, kv: (kv, 0)),
            pl.BlockSpec((tkv, head_dim), lambda b, h, q, kv: (kv, 0)),
        ],
        out_specs=pl.BlockSpec((1, tq, head_dim), lambda b, h, q, kv: (b, q, h)),
        scratch_shapes=[pltpu.VMEM((tq, head_dim), jnp.bfloat16),   # rotated, scaled q
                        pltpu.VMEM((tq, LANES), jnp.float32),       # m (lane-dense)
                        pltpu.VMEM((tq, LANES), jnp.float32),       # l (lane-dense)
                        pltpu.VMEM((tq, head_dim), jnp.float32)],   # acc
        compiler_params=pltpu.CompilerParams(
            dimension_semantics=("parallel", "parallel", "parallel", "arbitrary"),
            vmem_limit_bytes=VMEM_LIMIT),
    )(qkv, qkv, qkv, sin, cos, sin, cos)


# --------------------------------------------------------------------------- #
# Kernel 3: N-tiled O-projection + residual add
# --------------------------------------------------------------------------- #
def _oproj_kernel(x_ref, ctx_ref, wo_ref, o_ref):
    # x_ref: (1, ts, tn) f32 residual tile; ctx_ref: (1, ts, H) bf16; wo_ref: (H, tn) bf16
    attn = jnp.dot(ctx_ref[0], wo_ref[...], preferred_element_type=jnp.float32)
    o_ref[0] = x_ref[0] + attn


def o_proj_residual(x, ctx, wo, *, ts, tn):
    B, S, H = x.shape
    # TODO(synk): on bandwidth-poor v5e this O-proj could be folded into the
    # attention kernel (revisited output over the head axis) to avoid the ctx
    # HBM round-trip, and the residual stream could be carried in bf16.
    return pl.pallas_call(
        _oproj_kernel,
        out_shape=jax.ShapeDtypeStruct((B, S, H), jnp.float32),
        grid=(B, S // ts, H // tn),
        in_specs=[pl.BlockSpec((1, ts, tn), lambda b, s, n: (b, s, n)),
                  pl.BlockSpec((1, ts, H), lambda b, s, n: (b, s, 0)),
                  pl.BlockSpec((H, tn), lambda b, s, n: (0, n))],
        out_specs=pl.BlockSpec((1, ts, tn), lambda b, s, n: (b, s, n)),
        compiler_params=pltpu.CompilerParams(
            dimension_semantics=("parallel", "parallel", "parallel"),
            vmem_limit_bytes=VMEM_LIMIT),
    )(x, ctx, wo)


# --------------------------------------------------------------------------- #
# Kernel 4: post-norm + I-tiled gate/up/down MLP + residual (+ final norm)
# --------------------------------------------------------------------------- #
def _mlp_kernel(is_last, x_ref, w_post_ref, wg_ref, wu_ref, wd_ref, w_final_ref,
                o_ref, xn_ref, acc_ref):
    i = pl.program_id(2)

    @pl.when(i == 0)
    def _():
        xn_ref[...] = _rmsnorm(x_ref[0], w_post_ref[...]).astype(jnp.bfloat16)
        acc_ref[...] = jnp.zeros_like(acc_ref)

    g = jnp.dot(xn_ref[...], wg_ref[...], preferred_element_type=jnp.float32)
    u = jnp.dot(xn_ref[...], wu_ref[...], preferred_element_type=jnp.float32)
    h = _silu(g + u)                            # reference: act(gate(x) + up(x))
    acc_ref[...] += jnp.dot(h.astype(jnp.bfloat16), wd_ref[...],
                            preferred_element_type=jnp.float32)

    @pl.when(i == pl.num_programs(2) - 1)
    def _():
        y = x_ref[0] + acc_ref[...]             # residual
        if is_last:                             # fused final model RMSNorm
            y = _rmsnorm(y, w_final_ref[...])
        o_ref[0] = y


def mlp_block(x, p, norm_w, is_last, *, ts, ti):
    B, S, H = x.shape
    I = p["w_down"].shape[0]
    kernel = functools.partial(_mlp_kernel, is_last)
    return pl.pallas_call(
        kernel,
        out_shape=jax.ShapeDtypeStruct((B, S, H), jnp.float32),
        grid=(B, S // ts, I // ti),
        in_specs=[pl.BlockSpec((1, ts, H), lambda b, s, i: (b, s, 0)),
                  pl.BlockSpec((1, H), lambda b, s, i: (0, 0)),
                  pl.BlockSpec((H, ti), lambda b, s, i: (0, i)),
                  pl.BlockSpec((H, ti), lambda b, s, i: (0, i)),
                  pl.BlockSpec((ti, H), lambda b, s, i: (i, 0)),
                  pl.BlockSpec((1, H), lambda b, s, i: (0, 0))],
        out_specs=pl.BlockSpec((1, ts, H), lambda b, s, i: (b, s, 0)),
        scratch_shapes=[pltpu.VMEM((ts, H), jnp.bfloat16),   # normalized activations
                        pltpu.VMEM((ts, H), jnp.float32)],   # down-proj accumulator
        compiler_params=pltpu.CompilerParams(
            dimension_semantics=("parallel", "parallel", "arbitrary"),
            vmem_limit_bytes=VMEM_LIMIT),
    )(x, p["w_post_norm"], p["w_gate"], p["w_up"], p["w_down"], norm_w)


# --------------------------------------------------------------------------- #
# Rotary tables, params, model
# --------------------------------------------------------------------------- #
def make_rotary(seq_len, head_dim, base=10000.0):
    """Full-width (S, head_dim) tables: cos = [cos, cos], sin = [-sin, sin]
    (pre-signed so the kernel can use pltpu.roll for rotate-half)."""
    inv_freq = 1.0 / (base ** (jnp.arange(0, head_dim, 2, dtype=jnp.float32) / head_dim))
    t = jnp.arange(seq_len, dtype=jnp.float32)
    ang = jnp.einsum("i,j->ij", t, inv_freq)                   # (S, hd//2)
    sin, cos = jnp.sin(ang), jnp.cos(ang)
    sin_signed = jnp.concatenate([-sin, sin], axis=-1)         # (S, hd)
    cos_full = jnp.concatenate([cos, cos], axis=-1)            # (S, hd)
    return sin_signed, cos_full


def init_params(key, vocab_size, hidden_size, num_layers, intermediate_size):
    keys = jax.random.split(key, 1 + 7 * num_layers)
    embed = 0.02 * jax.random.normal(keys[0], (vocab_size, hidden_size), jnp.float32)
    layers = []
    for l in range(num_layers):
        k = keys[1 + 7 * l: 1 + 7 * (l + 1)]
        # weights generated directly in [in, out] layout (pre-transposed), bf16.
        wq = 0.02 * jax.random.normal(k[0], (hidden_size, hidden_size), jnp.float32)
        wk = 0.02 * jax.random.normal(k[1], (hidden_size, hidden_size), jnp.float32)
        wv = 0.02 * jax.random.normal(k[2], (hidden_size, hidden_size), jnp.float32)
        wo = 0.02 * jax.random.normal(k[3], (hidden_size, hidden_size), jnp.float32)
        wg = 0.02 * jax.random.normal(k[4], (hidden_size, intermediate_size), jnp.float32)
        wu = 0.02 * jax.random.normal(k[5], (hidden_size, intermediate_size), jnp.float32)
        wd = 0.02 * jax.random.normal(k[6], (intermediate_size, hidden_size), jnp.float32)
        layers.append(dict(
            wqkv=jnp.concatenate([wq, wk, wv], axis=1).astype(jnp.bfloat16),  # (H, 3H)
            wo=wo.astype(jnp.bfloat16),                                       # (H, H)
            w_gate=wg.astype(jnp.bfloat16),                                   # (H, I)
            w_up=wu.astype(jnp.bfloat16),                                     # (H, I)
            w_down=wd.astype(jnp.bfloat16),                                   # (I, H)
            w_in_norm=jnp.ones((1, hidden_size), jnp.float32),
            w_post_norm=jnp.ones((1, hidden_size), jnp.float32),
        ))
    norm_w = jnp.ones((1, hidden_size), jnp.float32)
    return embed, layers, norm_w


def llama_forward(input_ids, embed, layers, norm_w, num_heads):
    # token embedding gather is glue (plain JAX); compute lives in the Pallas kernels
    x = jnp.take(embed, input_ids, axis=0)                     # (B, S, H) f32
    B, S = input_ids.shape
    H = embed.shape[1]
    head_dim = H // num_heads
    I = layers[0]["w_down"].shape[0]
    sin, cos = make_rotary(S, head_dim)                        # computed once

    # Tile selection: S tiles of ~256 rows, 512-wide (256-multiple where possible)
    # N/K weight slabs so projection kernels stream weights instead of holding
    # full matrices in VMEM (fits v7x's 64 MiB as well as v5e/v6e).
    ts = _pick_tile(S, 256, 8)
    tq = _pick_tile(S, 256, 8)
    tkv = _pick_tile(S, 512, 8)
    tn_qkv = _pick_tile(3 * H, 512, 128)
    tn_o = _pick_tile(H, 512, 128)
    ti = _pick_tile(I, 512, 128)

    # TODO(synk): attention_mask argument (optional in the reference) is not
    # supported; only the default is_causal=True path is implemented.
    # TODO(synk): grid-invariant inputs (rotary tables, norm weights) could use
    # pipeline_mode=pl.Buffered(1) to save one VMEM buffer each.
    n = len(layers)
    for idx, p in enumerate(layers):
        qkv = qkv_proj(x, p["w_in_norm"], p["wqkv"], ts=ts, tn=tn_qkv)
        ctx = attention(qkv, sin, cos, num_heads, head_dim, tq=tq, tkv=tkv)
        x = o_proj_residual(x, ctx, p["wo"], ts=ts, tn=tn_o)
        x = mlp_block(x, p, norm_w, is_last=(idx == n - 1), ts=ts, ti=ti)
    return x


if __name__ == "__main__":
    vocab_size = 64
    hidden_size = 256          # head_dim = 128 -> MXU/lane friendly tiles
    num_hidden_layers = 2
    num_heads = 2
    intermediate_size = 512
    batch, seq_len = 2, 8

    key = jax.random.PRNGKey(0)
    k_param, k_ids = jax.random.split(key)
    embed, layers, norm_w = init_params(
        k_param, vocab_size, hidden_size, num_hidden_layers, intermediate_size)
    input_ids = jax.random.randint(k_ids, (batch, seq_len), 0, vocab_size)

    out = llama_forward(input_ids, embed, layers, norm_w, num_heads)
    out = jax.block_until_ready(out)
    assert out.shape == (batch, seq_len, hidden_size)
    assert bool(jnp.all(jnp.isfinite(out)))
    print("KERNEL_OK")
</pallas_src>

<mosaic_0001>
module attributes {stable_mosaic.version = 11 : i64} {
  func.func @_qkv_proj_kernel(%arg0: i32, %arg1: i32, %arg2: i32, %arg3: memref<1x8x256xf32, #tpu.memory_space<vmem>>, %arg4: memref<1x256xf32, #tpu.memory_space<vmem>>, %arg5: memref<256x384xbf16, #tpu.memory_space<vmem>>, %arg6: memref<1x8x384xbf16, #tpu.memory_space<vmem>>, %arg7: memref<8x256xbf16, #tpu.memory_space<vmem>>) attributes {dimension_semantics = [#tpu.dimension_semantics<parallel>, #tpu.dimension_semantics<parallel>, #tpu.dimension_semantics<arbitrary>], iteration_bounds = array<i64: 2, 1, 2>, scalar_prefetch = 0 : i64, scratch_operands = 1 : i64, tpu.core_type = #tpu.core_type<tc>, window_params = [{transform_indices = @transform_0, window_bounds = array<i64: 1, 8, 256>}, {pipeline_mode = #tpu.pipeline_mode<synchronous>, transform_indices = @transform_1, window_bounds = array<i64: 1, 256>}, {transform_indices = @transform_2, window_bounds = array<i64: 256, 384>}, {transform_indices = @transform_3, window_bounds = array<i64: 1, 8, 384>}]} {
    %c0_i32 = arith.constant 0 : i32
    %0 = arith.cmpi eq, %arg2, %c0_i32 : i32
    %1 = arith.extui %0 : i1 to i32
    %c0_i32_0 = arith.constant 0 : i32
    %2 = arith.cmpi ne, %1, %c0_i32_0 : i32
    scf.if %2 {
      %c0_7 = arith.constant 0 : index
      %c0_8 = arith.constant 0 : index
      %c0_9 = arith.constant 0 : index
      %10 = vector.load %arg3[%c0_7, %c0_8, %c0_9] : memref<1x8x256xf32, #tpu.memory_space<vmem>>, vector<1x8x256xf32>
      %11 = vector.shape_cast %10 : vector<1x8x256xf32> to vector<8x256xf32>
      %c0_10 = arith.constant 0 : index
      %c0_11 = arith.constant 0 : index
      %12 = vector.load %arg4[%c0_10, %c0_11] : memref<1x256xf32, #tpu.memory_space<vmem>>, vector<1x256xf32>
      %13 = arith.mulf %11, %11 : vector<8x256xf32>
      %cst_12 = arith.constant dense<0.000000e+00> : vector<8xf32>
      %14 = vector.multi_reduction <add>, %13, %cst_12 [1] : vector<8x256xf32> to vector<8xf32>
      %15 = vector.shape_cast %14 : vector<8xf32> to vector<8x1xf32>
      %cst_13 = arith.constant 2.560000e+02 : f32
      %16 = vector.broadcast %cst_13 : f32 to vector<8x1xf32>
      %17 = arith.divf %15, %16 : vector<8x1xf32>
      %cst_14 = arith.constant 9.99999974E-6 : f32
      %18 = vector.broadcast %cst_14 : f32 to vector<8x1xf32>
      %19 = arith.addf %17, %18 : vector<8x1xf32>
      %20 = math.rsqrt %19 : vector<8x1xf32>
      %21 = vector.broadcast %20 : vector<8x1xf32> to vector<8x256xf32>
      %22 = arith.mulf %11, %21 : vector<8x256xf32>
      %23 = vector.broadcast %12 : vector<1x256xf32> to vector<8x256xf32>
      %24 = arith.mulf %22, %23 : vector<8x256xf32>
      %25 = arith.truncf %24 : vector<8x256xf32> to vector<8x256xbf16>
      %c0_15 = arith.constant 0 : index
      %c0_16 = arith.constant 0 : index
      %26 = vector.load %arg7[%c0_15, %c0_16] : memref<8x256xbf16, #tpu.memory_space<vmem>>, vector<8x256xbf16>
      tpu.vector_store %arg7[%c0_15, %c0_16], %25 {strides = array<i32>} : memref<8x256xbf16, #tpu.memory_space<vmem>>, vector<8x256xbf16>,
    } else {
    }
    %c0 = arith.constant 0 : index
    %c0_1 = arith.constant 0 : index
    %3 = vector.load %arg7[%c0, %c0_1] : memref<8x256xbf16, #tpu.memory_space<vmem>>, vector<8x256xbf16>
    %c0_2 = arith.constant 0 : index
    %c0_3 = arith.constant 0 : index
    %4 = vector.load %arg5[%c0_2, %c0_3] : memref<256x384xbf16, #tpu.memory_space<vmem>>, vector<256x384xbf16>
    %cst = arith.constant dense<0.000000e+00> : vector<8x384xf32>
    %5 = tpu.matmul %3, %4, %cst {dimension_numbers = #tpu.dot_dimension_numbers<[1], [0], [0], [1], [0, 0, 1, 1], [], []>} : vector<8x256xbf16>, vector<256x384xbf16>, vector<8x384xf32> -> vector<8x384xf32>
    %6 = arith.truncf %5 : vector<8x384xf32> to vector<8x384xbf16>
    %c0_4 = arith.constant 0 : index
    %c0_5 = arith.constant 0 : index
    %c0_6 = arith.constant 0 : index
    %7 = vector.load %arg6[%c0_4, %c0_5, %c0_6] : memref<1x8x384xbf16, #tpu.memory_space<vmem>>, vector<1x8x384xbf16>
    %8 = vector.shape_cast %7 : vector<1x8x384xbf16> to vector<8x384xbf16>
    %9 = vector.shape_cast %6 : vector<8x384xbf16> to vector<1x8x384xbf16>
    tpu.vector_store %arg6[%c0_4, %c0_5, %c0_6], %9 {strides = array<i32>} : memref<1x8x384xbf16, #tpu.memory_space<vmem>>, vector<1x8x384xbf16>,
    return
  }
  func.func @transform_0(%arg0: i32, %arg1: i32, %arg2: i32) -> (i32, i32, i32) {
    %c0_i32 = arith.constant 0 : i32
    %c0_i32_0 = arith.constant 0 : i32
    return %arg0, %arg1, %c0_i32 : i32, i32, i32
  }
  func.func @transform_1(%arg0: i32, %arg1: i32, %arg2: i32) -> (i32, i32) {
    %c0_i32 = arith.constant 0 : i32
    %c0_i32_0 = arith.constant 0 : i32
    %c0_i32_1 = arith.constant 0 : i32
    return %c0_i32, %c0_i32_0 : i32, i32
  }
  func.func @transform_2(%arg0: i32, %arg1: i32, %arg2: i32) -> (i32, i32) {
    %c0_i32 = arith.constant 0 : i32
    %c0_i32_0 = arith.constant 0 : i32
    return %c0_i32, %arg2 : i32, i32
  }
  func.func @transform_3(%arg0: i32, %arg1: i32, %arg2: i32) -> (i32, i32, i32) {
    %c0_i32 = arith.constant 0 : i32
    return %arg0, %arg1, %arg2 : i32, i32, i32
  }
}

</mosaic_0001>

<llo_original>
// kernel: tpu_custom_call.1
$region0: #{tpu_custom_call.1}
  #allocation0 [shape = 'u32[]', space=smem, size = 0x4, offset = 0x4, fixed_abs, tag = 'smem constant byte address 0x4 - core index']
  #allocation1 [shape = 'u32[144,128]{1,0:T(1,128)}', space=vmem, size = 0x12000, scoped, tag = 'internal scratch']
  #allocation2 [shape = 'bf16[8,256]{1,0:T(8,128)(2,1)}', space=vmem, size = 0x1000, scoped, tag = 'scratch operand']
  %s0 = inlined_call_operand.hbm [shape: f32[2,8,256], index: 0, kind: input, shape index: {}]
  %s1 = inlined_call_operand.vmem [shape: f32[1,256], index: 1, kind: input, shape index: {}]
  %s2 = inlined_call_operand.hbm [shape: bf16[256,768], index: 2, kind: input, shape index: {}]
  %s3 = inlined_call_operand.hbm [shape: bf16[2,8,768], index: 3, kind: output, shape index: {}]
  %s4 = sld [smem:[#allocation0]]
  $region57: #{tpu_custom_call.1} parent=0
    _
  %s6 = ssub.s32 1, %s4
  %s7 = scalar_select 0, %s6, %s4
  $region1: #{tpu_custom_call.1} parent=0
    #allocation3 [shape = 'u8[16384]{0}', space=vmem, size = 0x4000, scoped, tag = 'input window, operand 0']
    #allocation4 [shape = 's32[2]{0}', space=sflag, size = 0x8, scoped, tag = 'scoped memory for tpu_custom_call.1']
    #allocation5 [shape = 's32[2]{0}', space=sflag, size = 0x8, scoped, tag = 'scoped memory for tpu_custom_call.1']
    #allocation6 [shape = 'u8[393216]{0}', space=vmem, size = 0x60000, scoped, tag = 'input window, operand 2']
    #allocation7 [shape = 's32[2]{0}', space=sflag, size = 0x8, scoped, tag = 'scoped memory for tpu_custom_call.1']
    #allocation8 [shape = 'u8[12288]{0}', space=vmem, size = 0x3000, scoped, tag = 'output window, operand 0']
    %8 = vsyncpa [#allocation4], 0
    %s9 = scalar_lea.sflag [#allocation4], 1
    %10 = vsyncpa %s9, 0
    %11 = vsyncpa [#allocation7], 0
    %s12 = scalar_lea.sflag [#allocation7], 1
    %13 = vsyncpa %s12, 0
    %14 = vsyncpa [#allocation5], 0
    %s15 = scalar_lea.sflag [#allocation5], 1
    %16 = vsyncpa %s15, 0
    loop: start=0, step=1, limit=6
    $region2: #{tpu_custom_call.1} parent=1 // loop_pre_header
      _
    $region3: #{tpu_custom_call.1} parent=1 // loop_header
      %s18 = sphi 0, %s22
      %p19 = scmp.ge.s32.totalorder %s18, 6
      %s25 = sphi 0, %s44
      %s26 = sphi 0, %s40
      %s27 = sphi 0, %s36
      %s28 = sphi 0, %s25
      %s29 = sphi 0, %s26
      %s30 = sphi 0, %s27
      %s31 = sphi 0, %s28
      %s32 = sphi 0, %s29
      %s33 = sphi 0, %s30
      %s49 = sphi 0, %s51
      %s52 = sphi 0, %s49
      %s53 = sphi 0, %s52
      %s69 = sphi 0, %s53
      %s73 = sphi 0, %s73
      %s75 = sphi 0, %s73
      %s76 = sphi 0, %s75
      %s90 = sphi 0, %s76
      %s96 = sphi 0, %s98
      %s99 = sphi 0, %s96
      %s100 = sphi 0, %s99
      %s116 = sphi 0, %s100
      %s126 = sphi 0, %s128
      %s129 = sphi 0, %s126
      %s130 = sphi 0, %s129
      %s146 = sphi 0, %s130
    $region4: #{tpu_custom_call.1} parent=1 // loop_header_branch
      %21 = sbr.rel (%p19) target = $region8
    $region5: #{tpu_custom_call.1} parent=1 // loop_body
      %s23 = ssub.s32 %s18, 1
      %s24 = ssub.s32 %s18, 2
      %s34 = sadd.s32 1, %s27
      %p35 = scmp.ge.s32.totalorder %s34, 2
      %s36 = scalar_select %p35, 0, %s34
      %s37 = sadd.s32 1, %s26
      %s38 = scalar_select %p35, %s37, %s26
      %p39 = scmp.ge.s32.totalorder %s38, 1
      %s40 = scalar_select %p39, 0, %s38
      %s41 = sadd.s32 1, %s25
      %s42 = scalar_select %p39, %s41, %s25
      %p43 = scmp.ge.s32.totalorder %s42, 2
      %s44 = scalar_select %p43, 0, %s42
      %s45 = ssub.s32 %s25, %s44
      %s46 = ssub.s32 %s26, %s40
      %s47 = sor.u32 %s45, %s46
      %p48 = scmp.eq.s32.totalorder %s47, 0
      %s50 = sadd.s32 %s49, 1
      %s51 = scalar_select %p48, %s49, %s50
      %p54 = pneg %p48
      %p55 = scmp.eq.s32.totalorder %s18, 3
      %p56 = por %p54, %p55
      %p57 = scmp.ne.s32.totalorder %s49, %s52
      %p58 = scmp.eq.s32.totalorder %s18, 0
      %p59 = por %p57, %p58
      %p60 = scmp.ne.s32.totalorder %s49, %s52
      %p61 = scmp.eq.s32.totalorder %s23, 3
      %p62 = por %p60, %p61
      %p63 = scmp.ne.s32.totalorder %s52, %s53
      %p64 = scmp.eq.s32.totalorder %s23, 0
      %p65 = por %p63, %p64
      %p66 = scmp.ne.s32.totalorder %s52, %s53
      %p67 = scmp.eq.s32.totalorder %s24, 3
      %p68 = por %p66, %p67
      %p70 = scmp.ne.s32.totalorder %s53, %s69
      %p71 = scmp.eq.s32.totalorder %s24, 0
      %p72 = por %p70, %p71
      %s74 = sadd.s32 %s73, 1
      %p77 = scmp.eq.s32.totalorder %s18, 3
      %p78 = scmp.ne.s32.totalorder %s73, %s75
      %p79 = scmp.eq.s32.totalorder %s18, 0
      %p80 = por %p78, %p79
      %p81 = scmp.ne.s32.totalorder %s73, %s75
      %p82 = scmp.eq.s32.totalorder %s23, 3
      %p83 = por %p81, %p82
      %p84 = scmp.ne.s32.totalorder %s75, %s76
      %p85 = scmp.eq.s32.totalorder %s23, 0
      %p86 = por %p84, %p85
      %p87 = scmp.ne.s32.totalorder %s75, %s76
      %p88 = scmp.eq.s32.totalorder %s24, 3
      %p89 = por %p87, %p88
      %p91 = scmp.ne.s32.totalorder %s76, %s90
      %p92 = scmp.eq.s32.totalorder %s24, 0
      %p93 = por %p91, %p92
      %s94 = ssub.s32 %s27, %s36
      %p95 = scmp.eq.s32.totalorder %s94, 0
      %s97 = sadd.s32 %s96, 1
      %s98 = scalar_select %p95, %s96, %s97
      %p101 = pneg %p95
      %p102 = scmp.eq.s32.totalorder %s18, 3
      %p103 = por %p101, %p102
      %p104 = scmp.ne.s32.totalorder %s96, %s99
      %p105 = scmp.eq.s32.totalorder %s18, 0
      %p106 = por %p104, %p105
      %p107 = scmp.ne.s32.totalorder %s96, %s99
      %p108 = scmp.eq.s32.totalorder %s23, 3
      %p109 = por %p107, %p108
      %p110 = scmp.ne.s32.totalorder %s99, %s100
      %p111 = scmp.eq.s32.totalorder %s23, 0
      %p112 = por %p110, %p111
      %p113 = scmp.ne.s32.totalorder %s99, %s100
      %p114 = scmp.eq.s32.totalorder %s24, 3
      %p115 = por %p113, %p114
      %p117 = scmp.ne.s32.totalorder %s100, %s116
      %p118 = scmp.eq.s32.totalorder %s24, 0
      %p119 = por %p117, %p118
      %s120 = ssub.s32 %s25, %s44
      %s121 = ssub.s32 %s26, %s40
      %s122 = sor.u32 %s120, %s121
      %s123 = ssub.s32 %s27, %s36
      %s124 = sor.u32 %s122, %s123
      %p125 = scmp.eq.s32.totalorder %s124, 0
      %s127 = sadd.s32 %s126, 1
      %s128 = scalar_select %p125, %s126, %s127
      %p131 = pneg %p125
      %p132 = scmp.eq.s32.totalorder %s18, 3
      %p133 = por %p131, %p132
      %p134 = scmp.ne.s32.totalorder %s126, %s129
      %p135 = scmp.eq.s32.totalorder %s18, 0
      %p136 = por %p134, %p135
      %p137 = scmp.ne.s32.totalorder %s126, %s129
      %p138 = scmp.eq.s32.totalorder %s23, 3
      %p139 = por %p137, %p138
      %p140 = scmp.ne.s32.totalorder %s129, %s130
      %p141 = scmp.eq.s32.totalorder %s23, 0
      %p142 = por %p140, %p141
      %p143 = scmp.ne.s32.totalorder %s129, %s130
      %p144 = scmp.eq.s32.totalorder %s24, 3
      %p145 = por %p143, %p144
      %p147 = scmp.ne.s32.totalorder %s130, %s146
      %p148 = scmp.eq.s32.totalorder %s24, 0
      %p149 = por %p147, %p148
      %p150 = scmp.le.s32.totalorder 1, %s18
      %p151 = scmp.lt.s32.totalorder %s18, 5
      %p152 = pnand %p150, %p151
      %p153 = pneg %p152
      // Predicated region
      $region9: #{tpu_custom_call.1} parent=5 // pred_check
        _
      $region10: #{tpu_custom_call.1} parent=5 // pred_check_branch
        %155 = sbr.rel (%p152) target = $region12
      $region11: #{tpu_custom_call.1} parent=5 // pred_region
        %s156 = ssub.s32 %s18, 1
        // Predicated region
        $region13: #{tpu_custom_call.1} parent=11 // pred_check
          %p157 = pneg %p86
        $region14: #{tpu_custom_call.1} parent=11 // pred_check_branch
          %159 = sbr.rel (%p157) target = $region16
        $region15: #{tpu_custom_call.1} parent=11 // pred_region
          _
        $region16: #{tpu_custom_call.1} parent=11 // pred_fallthru
          _
      $region12: #{tpu_custom_call.1} parent=5 // pred_fallthru
        _
      %p160 = scmp.lt.s32.totalorder %s18, 4
      // Predicated region
      $region17: #{tpu_custom_call.1} parent=5 // pred_check
        %p161 = pneg %p160
      $region18: #{tpu_custom_call.1} parent=5 // pred_check_branch
        %163 = sbr.rel (%p161) target = $region20
      $region19: #{tpu_custom_call.1} parent=5 // pred_region
        // Predicated region
        $region21: #{tpu_custom_call.1} parent=19 // pred_check
          %p164 = pneg %p59
        $region22: #{tpu_custom_call.1} parent=19 // pred_check_branch
          %166 = sbr.rel (%p164) target = $region24
        $region23: #{tpu_custom_call.1} parent=19 // pred_region
          %s167 = sand.u32 %s49, 1
          %s168 = scalar_lea.sflag [#allocation4], %s167
          %s169 = sand.u32 %s49, 1
          %s170 = smul.addr %s169, 16
          %s171 = scalar_lea.vmem [#allocation3], %s170
          %s173 = ssub.s32 256, 256
          %174 = vsyncadd %s168, %s173
          %s175 = smul.addr %s26, 2
          %s176 = smul.addr %s25, 2
          %s177 = sadd.s32 %s175, %s176
          %s178 = smul.addr %s177, 128
          %s179 = scalar_lea.hbm %s0, %s178
          %s181 = sshll.u32 %s171, 4
          %s182 = int_to_ptr.vmem [resolvable:$true] %s181
          %184 = dma.hbm_to_vmem [thread:$0]  %s179, 256, %s182, %s168
        $region24: #{tpu_custom_call.1} parent=19 // pred_fallthru
          _
        // Predicated region
        $region25: #{tpu_custom_call.1} parent=19 // pred_check
          %p185 = pneg %p106
        $region26: #{tpu_custom_call.1} parent=19 // pred_check_branch
          %187 = sbr.rel (%p185) target = $region28
        $region27: #{tpu_custom_call.1} parent=19 // pred_region
          %s188 = sand.u32 %s96, 1
          %s189 = scalar_lea.sflag [#allocation7], %s188
          %s190 = sand.u32 %s96, 1
          %s191 = smul.addr %s190, 384
          %s192 = scalar_lea.vmem [#allocation6], %s191
          %s193 = smul.u32 3, %s27
          %s195 = ssub.s32 6144, 6144
          %196 = vsyncadd %s189, %s195
          %s197 = smul.addr %s193, 64
          %s198 = scalar_lea.hbm %s2, %s197
          %s199 = sshll.u32 %s192, 4
          %s200 = int_to_ptr.vmem [resolvable:$true] %s199
          %205 = dma.hbm_to_vmem [thread:$0]  %s198, 6144, %s200, %s189, 384, 192, 12
        $region28: #{tpu_custom_call.1} parent=19 // pred_fallthru
          _
      $region20: #{tpu_custom_call.1} parent=5 // pred_fallthru
        _
      %p206 = scmp.le.s32.totalorder 1, %s18
      %p207 = scmp.lt.s32.totalorder %s18, 5
      %p208 = pnand %p206, %p207
      %p209 = pneg %p208
      // Predicated region
      $region29: #{tpu_custom_call.1} parent=5 // pred_check
        _
      $region30: #{tpu_custom_call.1} parent=5 // pred_check_branch
        %211 = sbr.rel (%p208) target = $region32
      $region31: #{tpu_custom_call.1} parent=5 // pred_region
        %s212 = ssub.s32 %s18, 1
        %s213 = sand.u32 %s52, 1
        %s214 = scalar_lea.sflag [#allocation4], %s213
        %s215 = sand.u32 %s52, 1
        %s216 = smul.addr %s215, 16
        %s217 = scalar_lea.vmem [#allocation3], %s216
        // Predicated region
        $region33: #{tpu_custom_call.1} parent=31 // pred_check
          %p218 = pneg %p65
        $region34: #{tpu_custom_call.1} parent=31 // pred_check_branch
          %220 = sbr.rel (%p218) target = $region36
        $region35: #{tpu_custom_call.1} parent=31 // pred_region
          %221 = dma.done %s214, 256
        $region36: #{tpu_custom_call.1} parent=31 // pred_fallthru
          _
        %s222 = sand.u32 %s99, 1
        %s223 = scalar_lea.sflag [#allocation7], %s222
        %s224 = sand.u32 %s99, 1
        %s225 = smul.addr %s224, 384
        %s226 = scalar_lea.vmem [#allocation6], %s225
        // Predicated region
        $region37: #{tpu_custom_call.1} parent=31 // pred_check
          %p227 = pneg %p112
        $region38: #{tpu_custom_call.1} parent=31 // pred_check_branch
          %229 = sbr.rel (%p227) target = $region40
        $region39: #{tpu_custom_call.1} parent=31 // pred_region
          %230 = dma.done %s223, 6144
        $region40: #{tpu_custom_call.1} parent=31 // pred_fallthru
          _
        %s231 = sand.u32 %s52, 1
        %s232 = scalar_lea.sflag [#allocation4], %s231
        %s233 = sand.u32 %s52, 1
        %s234 = smul.addr %s233, 16
        %s235 = scalar_lea.vmem [#allocation3], %s234
        %p236 = pneg %p65
        %p237 = pneg %p62
        %p238 = pneg %p86
        %p239 = pneg %p83
        %s240 = sand.u32 %s99, 1
        %s241 = scalar_lea.sflag [#allocation7], %s240
        %s242 = sand.u32 %s99, 1
        %s243 = smul.addr %s242, 384
        %s244 = scalar_lea.vmem [#allocation6], %s243
        %p245 = pneg %p112
        %p246 = pneg %p109
        %p247 = pneg %p142
        %p248 = pneg %p139
        %s249 = sand.u32 %s129, 1
        %s250 = scalar_lea.sflag [#allocation5], %s249
        %s251 = sand.u32 %s129, 1
        %s252 = smul.addr %s251, 12
        %s253 = scalar_lea.vmem [#allocation8], %s252
        %s254 = smul.u32 3, %s30
        %s255 = smul.u32 3, %s30
        %p257 = scmp.eq.s32.totalorder %s30, 0
        // Predicated region
        $region41: #{tpu_custom_call.1} parent=31 // pred_check
          %p258 = pneg %p257
        $region42: #{tpu_custom_call.1} parent=31 // pred_check_branch
          %260 = sbr.rel (%p258) target = $region44
        $region43: #{tpu_custom_call.1} parent=31 // pred_region
          %v261 = vld [vmem:[%s217] sm:$0xff]
          %v262 = vld [vmem:[%s217 + $0x8] sm:$0xff]
          %v263 = vld [vmem:[%s1] sm:$0x3]
          %v264 = vmul.f32 %v261, %v261
          %v265 = vmul.f32 %v262, %v262
          %v266 = vadd.f32 %v264, %v265
          %267 = vadd.xlane.f32.xlu0 %v266
          %v268 = vpop.xlane.xlu0 %267
          %v269 = vrcp.pop 256.0
          %v270 = vmul.f32 %v268, %v269
          %v271 = vadd.f32 %v270, 1e-05
          %v272 = vrsqrt.pop %v271
          %v273 = vmul.f32 %v261, %v272
          %v274 = vmul.f32 %v262, %v272
          %v276 = vlaneseq
          %v277 = vshrl.u32 %v276, 7
          %v278 = vsub.s32 0, %v277
          %v279 = vrot.slane %v263, %v278
          %v280 = vlaneseq
          %v281 = vshrl.u32 %v280, 7
          %v282 = vsub.s32 1, %v281
          %v283 = vrot.slane %v263, %v282
          %v286 = vmul.f32 %v273, %v279
          %v287 = vmul.f32 %v274, %v283
          %v288 = vpack.c.bf16 %v286, %v286
          %v289 = vpack.c.bf16 %v287, %v287
          %v292 = vunpack.c.l.b16 %v288
          %v293 = vunpack.c.l.b16 %v289
          %v294 = vpack.c.b16 %v293, %v292
          %296 = vst [vmem:[#allocation2] sm:$0xff] %v294
        $region44: #{tpu_custom_call.1} parent=31 // pred_fallthru
          _
        %v297 = vld [vmem:[#allocation2] sm:$0xff]
        %v298 = vld [vmem:[%s226] sm:$0xff]
        %v299 = vld [vmem:[%s226 + $0x8] sm:$0xf]
        %v300 = vld [vmem:[%s226 + $0xc] sm:$0xff]
        %v301 = vld [vmem:[%s226 + $0x14] sm:$0xf]
        %v302 = vld [vmem:[%s226 + $0x18] sm:$0xff]
        %v303 = vld [vmem:[%s226 + $0x20] sm:$0xf]
        %v304 = vld [vmem:[%s226 + $0x24] sm:$0xff]
        %v305 = vld [vmem:[%s226 + $0x2c] sm:$0xf]
        %v306 = vld [vmem:[%s226 + $0x30] sm:$0xff]
        %v307 = vld [vmem:[%s226 + $0x38] sm:$0xf]
        %v308 = vld [vmem:[%s226 + $0x3c] sm:$0xff]
        %v309 = vld [vmem:[%s226 + $0x44] sm:$0xf]
        %v310 = vld [vmem:[%s226 + $0x48] sm:$0xff]
        %v311 = vld [vmem:[%s226 + $0x50] sm:$0xf]
        %v312 = vld [vmem:[%s226 + $0x54] sm:$0xff]
        %v313 = vld [vmem:[%s226 + $0x5c] sm:$0xf]
        %v314 = vld [vmem:[%s226 + $0x60] sm:$0xff]
        %v315 = vld [vmem:[%s226 + $0x68] sm:$0xf]
        %v316 = vld [vmem:[%s226 + $0x6c] sm:$0xff]
        %v317 = vld [vmem:[%s226 + $0x74] sm:$0xf]
        %v318 = vld [vmem:[%s226 + $0x78] sm:$0xff]
        %v319 = vld [vmem:[%s226 + $0x80] sm:$0xf]
        %v320 = vld [vmem:[%s226 + $0x84] sm:$0xff]
        %v321 = vld [vmem:[%s226 + $0x8c] sm:$0xf]
        %v322 = vld [vmem:[%s226 + $0x90] sm:$0xff]
        %v323 = vld [vmem:[%s226 + $0x98] sm:$0xf]
        %v324 = vld [vmem:[%s226 + $0x9c] sm:$0xff]
        %v325 = vld [vmem:[%s226 + $0xa4] sm:$0xf]
        %v326 = vld [vmem:[%s226 + $0xa8] sm:$0xff]
        %v327 = vld [vmem:[%s226 + $0xb0] sm:$0xf]
        %v328 = vld [vmem:[%s226 + $0xb4] sm:$0xff]
        %v329 = vld [vmem:[%s226 + $0xbc] sm:$0xf]
        %v330 = vld [vmem:[%s226 + $0xc0] sm:$0xff]
        %v331 = vld [vmem:[%s226 + $0xc8] sm:$0xf]
        %v332 = vld [vmem:[%s226 + $0xcc] sm:$0xff]
        %v333 = vld [vmem:[%s226 + $0xd4] sm:$0xf]
        %v334 = vld [vmem:[%s226 + $0xd8] sm:$0xff]
        %v335 = vld [vmem:[%s226 + $0xe0] sm:$0xf]
        %v336 = vld [vmem:[%s226 + $0xe4] sm:$0xff]
        %v337 = vld [vmem:[%s226 + $0xec] sm:$0xf]
        %v338 = vld [vmem:[%s226 + $0xf0] sm:$0xff]
        %v339 = vld [vmem:[%s226 + $0xf8] sm:$0xf]
        %v340 = vld [vmem:[%s226 + $0xfc] sm:$0xff]
        %v341 = vld [vmem:[%s226 + $0x104] sm:$0xf]
        %v342 = vld [vmem:[%s226 + $0x108] sm:$0xff]
        %v343 = vld [vmem:[%s226 + $0x110] sm:$0xf]
        %v344 = vld [vmem:[%s226 + $0x114] sm:$0xff]
        %v345 = vld [vmem:[%s226 + $0x11c] sm:$0xf]
        %v346 = vld [vmem:[%s226 + $0x120] sm:$0xff]
        %v347 = vld [vmem:[%s226 + $0x128] sm:$0xf]
        %v348 = vld [vmem:[%s226 + $0x12c] sm:$0xff]
        %v349 = vld [vmem:[%s226 + $0x134] sm:$0xf]
        %v350 = vld [vmem:[%s226 + $0x138] sm:$0xff]
        %v351 = vld [vmem:[%s226 + $0x140] sm:$0xf]
        %v352 = vld [vmem:[%s226 + $0x144] sm:$0xff]
        %v353 = vld [vmem:[%s226 + $0x14c] sm:$0xf]
        %v354 = vld [vmem:[%s226 + $0x150] sm:$0xff]
        %v355 = vld [vmem:[%s226 + $0x158] sm:$0xf]
        %v356 = vld [vmem:[%s226 + $0x15c] sm:$0xff]
        %v357 = vld [vmem:[%s226 + $0x164] sm:$0xf]
        %v358 = vld [vmem:[%s226 + $0x168] sm:$0xff]
        %v359 = vld [vmem:[%s226 + $0x170] sm:$0xf]
        %v360 = vld [vmem:[%s226 + $0x174] sm:$0xff]
        %v361 = vld [vmem:[%s226 + $0x17c] sm:$0xf]
        %v363 = vunpack.c.l.b16 %v297
        %v364 = vunpack.c.h.b16 %v297
        %v365 = vpack.c.b16 %v363, %v363
        %v366 = vpack.c.b16 %v364, %v364
        %v433 = vunpack.c.l.b16 %v298
        %v434 = vunpack.c.h.b16 %v298
        %v435 = vunpack.c.l.b16 %v299
        %v436 = vunpack.c.l.b16 %v300
        %v437 = vunpack.c.h.b16 %v300
        %v438 = vunpack.c.l.b16 %v301
        %v439 = vunpack.c.l.b16 %v302
        %v440 = vunpack.c.h.b16 %v302
        %v441 = vunpack.c.l.b16 %v303
        %v442 = vunpack.c.l.b16 %v304
        %v443 = vunpack.c.h.b16 %v304
        %v444 = vunpack.c.l.b16 %v305
        %v445 = vunpack.c.l.b16 %v306
        %v446 = vunpack.c.h.b16 %v306
        %v447 = vunpack.c.l.b16 %v307
        %v448 = vunpack.c.l.b16 %v308
        %v449 = vunpack.c.h.b16 %v308
        %v450 = vunpack.c.l.b16 %v309
        %v451 = vunpack.c.l.b16 %v310
        %v452 = vunpack.c.h.b16 %v310
        %v453 = vunpack.c.l.b16 %v311
        %v454 = vunpack.c.l.b16 %v312
        %v455 = vunpack.c.h.b16 %v312
        %v456 = vunpack.c.l.b16 %v313
        %v457 = vunpack.c.l.b16 %v314
        %v458 = vunpack.c.h.b16 %v314
        %v459 = vunpack.c.l.b16 %v315
        %v460 = vunpack.c.l.b16 %v316
        %v461 = vunpack.c.h.b16 %v316
        %v462 = vunpack.c.l.b16 %v317
        %v463 = vunpack.c.l.b16 %v318
        %v464 = vunpack.c.h.b16 %v318
        %v465 = vunpack.c.l.b16 %v319
        %v466 = vunpack.c.l.b16 %v320
        %v467 = vunpack.c.h.b16 %v320
        %v468 = vunpack.c.l.b16 %v321
        %v469 = vunpack.c.l.b16 %v322
        %v470 = vunpack.c.h.b16 %v322
        %v471 = vunpack.c.l.b16 %v323
        %v472 = vunpack.c.l.b16 %v324
        %v473 = vunpack.c.h.b16 %v324
        %v474 = vunpack.c.l.b16 %v325
        %v475 = vunpack.c.l.b16 %v326
        %v476 = vunpack.c.h.b16 %v326
        %v477 = vunpack.c.l.b16 %v327
        %v478 = vunpack.c.l.b16 %v328
        %v479 = vunpack.c.h.b16 %v328
        %v480 = vunpack.c.l.b16 %v329
        %v481 = vunpack.c.l.b16 %v330
        %v482 = vunpack.c.h.b16 %v330
        %v483 = vunpack.c.l.b16 %v331
        %v484 = vunpack.c.l.b16 %v332
        %v485 = vunpack.c.h.b16 %v332
        %v486 = vunpack.c.l.b16 %v333
        %v487 = vunpack.c.l.b16 %v334
        %v488 = vunpack.c.h.b16 %v334
        %v489 = vunpack.c.l.b16 %v335
        %v490 = vunpack.c.l.b16 %v336
        %v491 = vunpack.c.h.b16 %v336
        %v492 = vunpack.c.l.b16 %v337
        %v493 = vunpack.c.l.b16 %v338
        %v494 = vunpack.c.h.b16 %v338
        %v495 = vunpack.c.l.b16 %v339
        %v496 = vunpack.c.l.b16 %v340
        %v497 = vunpack.c.h.b16 %v340
        %v498 = vunpack.c.l.b16 %v341
        %v499 = vunpack.c.l.b16 %v342
        %v500 = vunpack.c.h.b16 %v342
        %v501 = vunpack.c.l.b16 %v343
        %v502 = vunpack.c.l.b16 %v344
        %v503 = vunpack.c.h.b16 %v344
        %v504 = vunpack.c.l.b16 %v345
        %v505 = vunpack.c.l.b16 %v346
        %v506 = vunpack.c.h.b16 %v346
        %v507 = vunpack.c.l.b16 %v347
        %v508 = vunpack.c.l.b16 %v348
        %v509 = vunpack.c.h.b16 %v348
        %v510 = vunpack.c.l.b16 %v349
        %v511 = vunpack.c.l.b16 %v350
        %v512 = vunpack.c.h.b16 %v350
        %v513 = vunpack.c.l.b16 %v351
        %v514 = vunpack.c.l.b16 %v352
        %v515 = vunpack.c.h.b16 %v352
        %v516 = vunpack.c.l.b16 %v353
        %v517 = vunpack.c.l.b16 %v354
        %v518 = vunpack.c.h.b16 %v354
        %v519 = vunpack.c.l.b16 %v355
        %v520 = vunpack.c.l.b16 %v356
        %v521 = vunpack.c.h.b16 %v356
        %v522 = vunpack.c.l.b16 %v357
        %v523 = vunpack.c.l.b16 %v358
        %v524 = vunpack.c.h.b16 %v358
        %v525 = vunpack.c.l.b16 %v359
        %v526 = vunpack.c.l.b16 %v360
        %v527 = vunpack.c.h.b16 %v360
        %v528 = vunpack.c.l.b16 %v361
        %v529 = vpack.c.b16 %v436, %v433
        %v530 = vpack.c.b16 %v437, %v434
        %v531 = vpack.c.b16 %v438, %v435
        %v532 = vpack.c.b16 %v442, %v439
        %v533 = vpack.c.b16 %v443, %v440
        %v534 = vpack.c.b16 %v444, %v441
        %v535 = vpack.c.b16 %v448, %v445
        %v536 = vpack.c.b16 %v449, %v446
        %v537 = vpack.c.b16 %v450, %v447
        %v538 = vpack.c.b16 %v454, %v451
        %v539 = vpack.c.b16 %v455, %v452
        %v540 = vpack.c.b16 %v456, %v453
        %v541 = vpack.c.b16 %v460, %v457
        %v542 = vpack.c.b16 %v461, %v458
        %v543 = vpack.c.b16 %v462, %v459
        %v544 = vpack.c.b16 %v466, %v463
        %v545 = vpack.c.b16 %v467, %v464
        %v546 = vpack.c.b16 %v468, %v465
        %v547 = vpack.c.b16 %v472, %v469
        %v548 = vpack.c.b16 %v473, %v470
        %v549 = vpack.c.b16 %v474, %v471
        %v550 = vpack.c.b16 %v478, %v475
        %v551 = vpack.c.b16 %v479, %v476
        %v552 = vpack.c.b16 %v480, %v477
        %v553 = vpack.c.b16 %v484, %v481
        %v554 = vpack.c.b16 %v485, %v482
        %v555 = vpack.c.b16 %v486, %v483
        %v556 = vpack.c.b16 %v490, %v487
        %v557 = vpack.c.b16 %v491, %v488
        %v558 = vpack.c.b16 %v492, %v489
        %v559 = vpack.c.b16 %v496, %v493
        %v560 = vpack.c.b16 %v497, %v494
        %v561 = vpack.c.b16 %v498, %v495
        %v562 = vpack.c.b16 %v502, %v499
        %v563 = vpack.c.b16 %v503, %v500
        %v564 = vpack.c.b16 %v504, %v501
        %v565 = vpack.c.b16 %v508, %v505
        %v566 = vpack.c.b16 %v509, %v506
        %v567 = vpack.c.b16 %v510, %v507
        %v568 = vpack.c.b16 %v514, %v511
        %v569 = vpack.c.b16 %v515, %v512
        %v570 = vpack.c.b16 %v516, %v513
        %v571 = vpack.c.b16 %v520, %v517
        %v572 = vpack.c.b16 %v521, %v518
        %v573 = vpack.c.b16 %v522, %v519
        %v574 = vpack.c.b16 %v526, %v523
        %v575 = vpack.c.b16 %v527, %v524
        %v576 = vpack.c.b16 %v528, %v525
        %625 = vmatprep.subr.bf16.mxu0 %v530
        %626 = vmatpush1.bf16.msra.mxu0 %v529
        %627 = vmatprep.subr.bf16.mxu0 %v533
        %628 = vmatpush1.bf16.msra.mxu0 %v532
        %629 = vmatprep.subr.bf16.mxu0 %v536
        %630 = vmatpush1.bf16.msra.mxu0 %v535
        %631 = vmatprep.subr.bf16.mxu0 %v539
        %632 = vmatpush1.bf16.msra.mxu0 %v538
        %633 = vmatprep.subr.bf16.mxu0 %v542
        %634 = vmatpush1.bf16.msra.mxu0 %v541
        %635 = vmatprep.subr.bf16.mxu0 %v545
        %636 = vmatpush1.bf16.msra.mxu0 %v544
        %637 = vmatprep.subr.bf16.mxu0 %v548
        %638 = vmatpush1.bf16.msra.mxu0 %v547
        %639 = vmatprep.subr.bf16.mxu0 %v551
        %640 = vmatpush1.bf16.msra.mxu0 %v550
        %641 = vmatprep.subr.bf16.mxu0 %v554
        %642 = vmatpush1.bf16.msra.mxu0 %v553
        %643 = vmatprep.subr.bf16.mxu0 %v557
        %644 = vmatpush1.bf16.msra.mxu0 %v556
        %645 = vmatprep.subr.bf16.mxu0 %v560
        %646 = vmatpush1.bf16.msra.mxu0 %v559
        %647 = vmatprep.subr.bf16.mxu0 %v563
        %648 = vmatpush1.bf16.msra.mxu0 %v562
        %649 = vmatprep.subr.bf16.mxu0 %v566
        %650 = vmatpush1.bf16.msra.mxu0 %v565
        %651 = vmatprep.subr.bf16.mxu0 %v569
        %652 = vmatpush1.bf16.msra.mxu0 %v568
        %653 = vmatprep.subr.bf16.mxu0 %v572
        %654 = vmatpush1.bf16.msra.mxu0 %v571
        %655 = vmatprep.subr.bf16.mxu0 %v575
        %656 = vmatpush1.bf16.msra.mxu0 %v574
        %657 = vmatprep.mubr.bf16.mxu0 %v366
        %658 = vmatmul.mubr.bf16.gmra.mrb[0].mxu0 %v365
        %v659 = vpop.f32.mrb[0].mxu0
        %v660 = vadd.f32 0.0, %v659
        %v661 = vpop.f32.mrb[0].mxu0
        %v662 = vadd.f32 0.0, %v661
        %v663 = vpop.f32.mrb[0].mxu0
        %v664 = vpop.f32.mrb[0].mxu0
        %665 = vdwg.mxu0
        %666 = vmatprep.subr.bf16.mxu0 0
        %667 = vmatpush1.bf16.msra.mxu0 %v531
        %668 = vmatprep.subr.bf16.mxu0 0
        %669 = vmatpush1.bf16.msra.mxu0 %v534
        %670 = vmatprep.subr.bf16.mxu0 0
        %671 = vmatpush1.bf16.msra.mxu0 %v537
        %672 = vmatprep.subr.bf16.mxu0 0
        %673 = vmatpush1.bf16.msra.mxu0 %v540
        %674 = vmatprep.subr.bf16.mxu0 0
        %675 = vmatpush1.bf16.msra.mxu0 %v543
        %676 = vmatprep.subr.bf16.mxu0 0
        %677 = vmatpush1.bf16.msra.mxu0 %v546
        %678 = vmatprep.subr.bf16.mxu0 0
        %679 = vmatpush1.bf16.msra.mxu0 %v549
        %680 = vmatprep.subr.bf16.mxu0 0
        %681 = vmatpush1.bf16.msra.mxu0 %v552
        %682 = vmatprep.subr.bf16.mxu0 0
        %683 = vmatpush1.bf16.msra.mxu0 %v555
        %684 = vmatprep.subr.bf16.mxu0 0
        %685 = vmatpush1.bf16.msra.mxu0 %v558
        %686 = vmatprep.subr.bf16.mxu0 0
        %687 = vmatpush1.bf16.msra.mxu0 %v561
        %688 = vmatprep.subr.bf16.mxu0 0
        %689 = vmatpush1.bf16.msra.mxu0 %v564
        %690 = vmatprep.subr.bf16.mxu0 0
        %691 = vmatpush1.bf16.msra.mxu0 %v567
        %692 = vmatprep.subr.bf16.mxu0 0
        %693 = vmatpush1.bf16.msra.mxu0 %v570
        %694 = vmatprep.subr.bf16.mxu0 0
        %695 = vmatpush1.bf16.msra.mxu0 %v573
        %696 = vmatprep.subr.bf16.mxu0 0
        %697 = vmatpush1.bf16.msra.mxu0 %v576
        %698 = vmatprep.mubr.bf16.mxu0 %v366
        %699 = vmatmul.mubr.bf16.gmra.mrb[0].mxu0 %v365
        %v700 = vpop.f32.mrb[0].mxu0
        %v701 = vadd.f32 0.0, %v700
        %v702 = vpop.f32.mrb[0].mxu0
        %v703 = vpop.f32.mrb[0].mxu0
        %v704 = vpop.f32.mrb[0].mxu0
        %705 = vdwg.mxu0
        %v706 = vpack.c.bf16 %v660, %v660
        %v707 = vpack.c.bf16 %v662, %v662
        %v708 = vpack.c.bf16 %v701, %v701
        %v712 = vunpack.c.l.b16 %v706
        %v713 = vunpack.c.l.b16 %v707
        %v714 = vunpack.c.l.b16 %v708
        %v715 = vpack.c.b16 %v713, %v712
        %v716 = vpack.c.b16 %v714, %v714
        %719 = vst [vmem:[%s253] sm:$0xff] %v715
        %720 = vst [vmem:[%s253 + $0x8] sm:$0xf] %v716
        %s721 = sand.u32 %s129, 1
        %s722 = scalar_lea.sflag [#allocation5], %s721
        %s723 = sand.u32 %s129, 1
        %s724 = smul.addr %s723, 12
        %s725 = scalar_lea.vmem [#allocation8], %s724
        // Predicated region
        $region45: #{tpu_custom_call.1} parent=31 // pred_check
          %p726 = pneg %p139
        $region46: #{tpu_custom_call.1} parent=31 // pred_check_branch
          %728 = sbr.rel (%p726) target = $region48
        $region47: #{tpu_custom_call.1} parent=31 // pred_region
          %s729 = smul.u32 3, %s30
          %s731 = ssub.s32 192, 192
          %732 = vsyncadd %s722, %s731
          %s733 = smul.addr %s29, 6
          %s734 = sadd.s32 %s729, %s733
          %s735 = smul.addr %s28, 6
          %s736 = sadd.s32 %s734, %s735
          %s737 = smul.addr %s736, 64
          %s738 = scalar_lea.hbm %s3, %s737
          %s740 = sshll.u32 %s725, 4
          %s741 = int_to_ptr.vmem [resolvable:$true] %s740
          %743 = dma.vmem_to_hbm [thread:$0]  %s741, 192, %s738, %s722
        $region48: #{tpu_custom_call.1} parent=31 // pred_fallthru
          _
      $region32: #{tpu_custom_call.1} parent=5 // pred_fallthru
        _
      %p744 = scmp.le.s32.totalorder 2, %s18
      // Predicated region
      $region49: #{tpu_custom_call.1} parent=5 // pred_check
        %p745 = pneg %p744
      $region50: #{tpu_custom_call.1} parent=5 // pred_check_branch
        %747 = sbr.rel (%p745) target = $region52
      $region51: #{tpu_custom_call.1} parent=5 // pred_region
        %s748 = ssub.s32 %s18, 2
        // Predicated region
        $region53: #{tpu_custom_call.1} parent=51 // pred_check
          %p749 = pneg %p145
        $region54: #{tpu_custom_call.1} parent=51 // pred_check_branch
          %751 = sbr.rel (%p749) target = $region56
        $region55: #{tpu_custom_call.1} parent=51 // pred_region
          %s752 = sand.u32 %s130, 1
          %s753 = scalar_lea.sflag [#allocation5], %s752
          %s754 = sand.u32 %s130, 1
          %s755 = smul.addr %s754, 12
          %s756 = scalar_lea.vmem [#allocation8], %s755
          %757 = dma.done %s753, 192
        $region56: #{tpu_custom_call.1} parent=51 // pred_fallthru
          _
      $region52: #{tpu_custom_call.1} parent=5 // pred_fallthru
        _
    $region6: #{tpu_custom_call.1} parent=1 // loop_footer
      %s22 = sadd.s32 1, %s18
    $region7: #{tpu_custom_call.1} parent=1 // loop_footer_branch
      %17 = sbr.rel target = $region3
    $region8: #{tpu_custom_call.1} parent=1 // loop_exit
      _
    %758 = vsyncpa [#allocation4], 1
    %s759 = scalar_lea.sflag [#allocation4], 1
    %760 = vsyncpa %s759, 1
    %761 = vsyncpa [#allocation7], 1
    %s762 = scalar_lea.sflag [#allocation7], 1
    %763 = vsyncpa %s762, 1
    %764 = vsyncpa [#allocation5], 1
    %s765 = scalar_lea.sflag [#allocation5], 1
    %766 = vsyncpa %s765, 1

</llo_original>
